<compile_context>
chip_gen: v5e
topology: v5e:2x2
jax: 0.10.0
libtpu: 0.0.40
codegen_flags: <defaults>
</compile_context>

<pallas_src>
import functools

import jax
import jax.numpy as jnp
from jax.experimental import pallas as pl
from jax.experimental.pallas import tpu as pltpu


def _cdiv(a, b):
    return (a + b - 1) // b


def _round_up(x, m):
    return ((x + m - 1) // m) * m


def _vmem_budgets():
    """(vmem_limit_bytes, x_streaming_buffer_budget_bytes) per TPU generation."""
    try:
        kind = jax.devices()[0].device_kind.lower()
    except Exception:
        kind = ""
    if any(t in kind for t in ("v2", "v3", "v4", "v5", "v6")):
        # 128 MiB physical VMEM: raise the scoped limit so streaming tiles are big.
        return 96 * 1024 * 1024, 64 * 1024 * 1024
    # v7x (64 MiB per TensorCore) or unknown generation: stay conservative.
    return 48 * 1024 * 1024, 28 * 1024 * 1024


def _max_rows_per_tile(c, itemsize, budget_bytes, n_buffers=2):
    """Max 128-lane rows per streamed tile; exact accounting (dense layout)."""
    bytes_per_row = c * 128 * itemsize * n_buffers   # n_buffers pipeline copies of x
    rows = budget_bytes // bytes_per_row
    return max(16, (rows // 16) * 16)                # multiple of 16 (bf16 sublane tile)


def cvc_lc_kernel(x_ref, out_ref, *, rows_total, rows_per_tile, tiles_per_split,
                  sub, mask_rows):
    # x_ref  : (1, C, TR, 128)        current batch row, current row-tile (lane-dense)
    # out_ref: (1, 1, C, SUB, 128)    lane-parallel partial sums, resident over k
    s = pl.program_id(0)          # reduction split (v7x two-core path), usually size 1
    k = pl.program_id(2)          # reduction step (last grid axis)

    @pl.when(k == 0)
    def _init():
        out_ref[...] = jnp.zeros_like(out_ref)

    x = x_ref[...].astype(jnp.float32)               # (1, C, TR, 128)

    if mask_rows:
        # Ragged tail / duplicated clamped tile: zero rows beyond the true extent.
        base = (s * tiles_per_split + k) * rows_per_tile
        rid = base + jax.lax.broadcasted_iota(
            jnp.int32, (1, 1, rows_per_tile, 1), 2)
        x = jnp.where(rid < rows_total, x, 0.0)

    c = x.shape[1]
    if sub == 1:
        # Rare path (row count not a multiple of 8): single cross-sublane reduce.
        contrib = jnp.sum(x, axis=2, keepdims=True)              # (1, C, 1, 128)
    else:
        groups = rows_per_tile // sub
        xg = x.reshape(1, c, groups, sub, x.shape[-1])           # free retiling
        contrib = jnp.sum(xg, axis=2)                            # (1, C, 8, 128) - VALU adds

    out_ref[...] += contrib[:, None]                             # (1, 1, C, SUB, 128)


def cvc_lc_forward(block, w_feat, w_cls_t, b_cls, *,
                   max_rows_per_tile=None, num_splits=None):
    """block: (B, T, C, H, W) -> logits (B, num_class)."""
    B, T, C, H, W = block.shape
    N = T * H * W
    LANES = 128

    # PyTorch: block.view(B, C, T, H, W) -- row-major reinterpretation (reshape).
    x = jnp.reshape(block, (B, C, N))

    lane_pad = (-N) % LANES
    if lane_pad:
        # TODO(synk): only taken when N % 128 != 0 (<128 zeros per (b,c) row);
        # typical video shapes hit the copy-free path.
        x = jnp.pad(x, ((0, 0), (0, 0), (0, lane_pad)))
    R = (N + lane_pad) // LANES
    x = jnp.reshape(x, (B, C, R, LANES))             # free metadata reshape; lane-dense

    vmem_limit, x_budget = _vmem_budgets()
    if max_rows_per_tile is None:
        max_rows_per_tile = _max_rows_per_tile(C, x.dtype.itemsize, x_budget,
                                               n_buffers=2)
    max_rows_per_tile = max(16, int(max_rows_per_tile))

    # Tile policy: bounded padding (never round N up to a huge tile).
    if R <= max_rows_per_tile:
        tile_rows, n_tiles = R, 1
    else:
        n_tiles = _cdiv(R, max_rows_per_tile)
        tile_rows = _round_up(_cdiv(R, n_tiles), 16)
        n_tiles = _cdiv(R, tile_rows)

    sub = 8 if tile_rows % 8 == 0 else 1

    # v7x: when B alone can't fill both TensorCores, split the reduction axis.
    if num_splits is None:
        num_splits = 2 if (B < 2 and n_tiles >= 2) else 1
    S = max(1, min(int(num_splits), n_tiles))
    K = _cdiv(n_tiles, S)
    mask_rows = (S * K * tile_rows) != R
    last_block = n_tiles - 1

    kernel = functools.partial(
        cvc_lc_kernel, rows_total=R, rows_per_tile=tile_rows,
        tiles_per_split=K, sub=sub, mask_rows=mask_rows)

    partial_sums = pl.pallas_call(
        kernel,
        out_shape=jax.ShapeDtypeStruct((S, B, C, sub, LANES), jnp.float32),
        grid=(S, B, K),
        in_specs=[
            # Streamed input: auto-pipelined (default 2 buffers is enough; compute
            # per tile is negligible vs DMA).  Block index clamped so an (over-)
            # split never addresses past the array; the row mask zeroes duplicates.
            pl.BlockSpec(
                (1, C, tile_rows, LANES),
                lambda s, b, k: (b, 0, jnp.minimum(s * K + k, last_block), 0)),
        ],
        out_specs=pl.BlockSpec(
            (1, 1, C, sub, LANES), lambda s, b, k: (s, b, 0, 0, 0)),
        compiler_params=pltpu.CompilerParams(
            dimension_semantics=("parallel", "parallel", "arbitrary"),
            vmem_limit_bytes=vmem_limit,
        ),
    )(x)

    # Finalize in plain XLA: cross-lane/sublane/split reduce -> mean -> backbone
    # stub projection -> linear classifier (single batched MXU matmuls).
    pooled = jnp.sum(partial_sums, axis=(0, 3, 4)) * (1.0 / float(N))   # (B, C)
    feat = jnp.dot(pooled, w_feat.astype(jnp.float32),
                   preferred_element_type=jnp.float32)                  # (B, D)
    logits = jnp.dot(feat, w_cls_t.astype(jnp.float32),
                     preferred_element_type=jnp.float32) + b_cls.astype(jnp.float32)
    return logits


if __name__ == "__main__":
    # Small shapes consistent with the module's forward: video clip (B, T, C, H, W).
    B, T, C, H, W = 2, 8, 3, 16, 16            # sample_size = 16
    feature_dim = 512                           # uniformer_small feature dim
    num_class = 101

    key = jax.random.PRNGKey(0)
    k_x, k_wf, k_wc = jax.random.split(key, 3)

    # bf16 producer: halves streamed HBM bytes on this bandwidth-bound kernel.
    block = jax.random.normal(k_x, (B, T, C, H, W), dtype=jnp.float32).astype(jnp.bfloat16)

    # Backbone-stub projection (deterministic).
    w_feat = jax.random.normal(k_wf, (C, feature_dim), dtype=jnp.float32) * 0.02
    # linear_classifier init: weight ~ N(0, 0.01), bias = 0 (as in _initialize_weights).
    # Stored transposed: (feature_dim, num_class).
    w_cls_t = jax.random.normal(k_wc, (feature_dim, num_class), dtype=jnp.float32) * 0.01
    b_cls = jnp.zeros((num_class,), dtype=jnp.float32)

    out = jax.block_until_ready(cvc_lc_forward(block, w_feat, w_cls_t, b_cls))
    assert out.shape == (B, num_class) and out.dtype == jnp.float32

    # Pure-JAX reference of the same (stubbed) forward on the same bf16 input.
    x_flat = jnp.reshape(block, (B, C, T * H * W)).astype(jnp.float32)
    ref = jnp.mean(x_flat, axis=-1) @ w_feat @ w_cls_t + b_cls
    assert jnp.allclose(out, ref, rtol=1e-3, atol=1e-3), float(jnp.max(jnp.abs(out - ref)))

    # Extra coverage: B=1 with a small forced tile exercises the multi-tile,
    # two-core split, row-masking and index-clamping paths.
    B2, T2 = 1, 9
    blk2 = jax.random.normal(k_x, (B2, T2, C, H, W), dtype=jnp.float32).astype(jnp.bfloat16)
    out2 = jax.block_until_ready(
        cvc_lc_forward(blk2, w_feat, w_cls_t, b_cls, max_rows_per_tile=16))
    ref2_flat = jnp.reshape(blk2, (B2, C, T2 * H * W)).astype(jnp.float32)
    ref2 = jnp.mean(ref2_flat, axis=-1) @ w_feat @ w_cls_t + b_cls
    assert jnp.allclose(out2, ref2, rtol=1e-3, atol=1e-3), float(jnp.max(jnp.abs(out2 - ref2)))

    print("KERNEL_OK")
</pallas_src>

<mosaic_0001>
module attributes {stable_mosaic.version = 11 : i64} {
  func.func @cvc_lc_kernel(%arg0: i32, %arg1: i32, %arg2: i32, %arg3: memref<1x3x16x128xbf16, #tpu.memory_space<vmem>>, %arg4: memref<1x1x3x8x128xf32, #tpu.memory_space<vmem>>) attributes {dimension_semantics = [#tpu.dimension_semantics<parallel>, #tpu.dimension_semantics<parallel>, #tpu.dimension_semantics<arbitrary>], iteration_bounds = array<i64: 1, 2, 1>, scalar_prefetch = 0 : i64, scratch_operands = 0 : i64, tpu.core_type = #tpu.core_type<tc>, window_params = [{transform_indices = @transform_0, window_bounds = array<i64: 1, 3, 16, 128>}, {transform_indices = @transform_1, window_bounds = array<i64: 1, 1, 3, 8, 128>}]} {
    %c0_i32 = arith.constant 0 : i32
    %0 = arith.cmpi eq, %arg2, %c0_i32 : i32
    %1 = arith.extui %0 : i1 to i32
    %c0_i32_0 = arith.constant 0 : i32
    %2 = arith.cmpi ne, %1, %c0_i32_0 : i32
    scf.if %2 {
      %cst_14 = arith.constant 0.000000e+00 : f32
      %11 = vector.broadcast %cst_14 : f32 to vector<1x1x3x8x128xf32>
      %c0_15 = arith.constant 0 : index
      %c0_16 = arith.constant 0 : index
      %c0_17 = arith.constant 0 : index
      %c0_18 = arith.constant 0 : index
      %c0_19 = arith.constant 0 : index
      %12 = vector.load %arg4[%c0_15, %c0_16, %c0_17, %c0_18, %c0_19] : memref<1x1x3x8x128xf32, #tpu.memory_space<vmem>>, vector<1x1x3x8x128xf32>
      tpu.vector_store %arg4[%c0_15, %c0_16, %c0_17, %c0_18, %c0_19], %11 {strides = array<i32>} : memref<1x1x3x8x128xf32, #tpu.memory_space<vmem>>, vector<1x1x3x8x128xf32>,
    } else {
    }
    %c0 = arith.constant 0 : index
    %c0_1 = arith.constant 0 : index
    %c0_2 = arith.constant 0 : index
    %c0_3 = arith.constant 0 : index
    %3 = vector.load %arg3[%c0, %c0_1, %c0_2, %c0_3] : memref<1x3x16x128xbf16, #tpu.memory_space<vmem>>, vector<1x3x16x128xbf16>
    %4 = arith.extf %3 : vector<1x3x16x128xbf16> to vector<1x3x16x128xf32>
    %5 = vector.shape_cast %4 : vector<1x3x16x128xf32> to vector<1x3x2x8x128xf32>
    %cst = arith.constant dense<0.000000e+00> : vector<1x3x8x128xf32>
    %6 = vector.multi_reduction <add>, %5, %cst [2] : vector<1x3x2x8x128xf32> to vector<1x3x8x128xf32>
    %c0_4 = arith.constant 0 : index
    %c0_5 = arith.constant 0 : index
    %c0_6 = arith.constant 0 : index
    %c0_7 = arith.constant 0 : index
    %c0_8 = arith.constant 0 : index
    %7 = vector.load %arg4[%c0_4, %c0_5, %c0_6, %c0_7, %c0_8] : memref<1x1x3x8x128xf32, #tpu.memory_space<vmem>>, vector<1x1x3x8x128xf32>
    %8 = vector.shape_cast %6 : vector<1x3x8x128xf32> to vector<1x1x3x8x128xf32>
    %9 = arith.addf %7, %8 : vector<1x1x3x8x128xf32>
    %c0_9 = arith.constant 0 : index
    %c0_10 = arith.constant 0 : index
    %c0_11 = arith.constant 0 : index
    %c0_12 = arith.constant 0 : index
    %c0_13 = arith.constant 0 : index
    %10 = vector.load %arg4[%c0_9, %c0_10, %c0_11, %c0_12, %c0_13] : memref<1x1x3x8x128xf32, #tpu.memory_space<vmem>>, vector<1x1x3x8x128xf32>
    tpu.vector_store %arg4[%c0_9, %c0_10, %c0_11, %c0_12, %c0_13], %9 {strides = array<i32>} : memref<1x1x3x8x128xf32, #tpu.memory_space<vmem>>, vector<1x1x3x8x128xf32>,
    return
  }
  func.func @transform_0(%arg0: i32, %arg1: i32, %arg2: i32) -> (i32, i32, i32, i32) {
    %c1_i32 = arith.constant 1 : i32
    %0 = arith.muli %arg0, %c1_i32 : i32
    %1 = arith.addi %0, %arg2 : i32
    %c0_i32 = arith.constant 0 : i32
    %2 = arith.minsi %1, %c0_i32 : i32
    %c0_i32_0 = arith.constant 0 : i32
    %c0_i32_1 = arith.constant 0 : i32
    %c0_i32_2 = arith.constant 0 : i32
    return %arg1, %c0_i32_0, %2, %c0_i32_1 : i32, i32, i32, i32
  }
  func.func @transform_1(%arg0: i32, %arg1: i32, %arg2: i32) -> (i32, i32, i32, i32, i32) {
    %c0_i32 = arith.constant 0 : i32
    %c0_i32_0 = arith.constant 0 : i32
    %c0_i32_1 = arith.constant 0 : i32
    %c0_i32_2 = arith.constant 0 : i32
    return %arg0, %arg1, %c0_i32, %c0_i32_0, %c0_i32_1 : i32, i32, i32, i32, i32
  }
}

</mosaic_0001>

<llo_original>
// kernel: tpu_custom_call.1
$region0: #{tpu_custom_call.1}
  #allocation0 [shape = 'u32[]', space=smem, size = 0x4, offset = 0x4, fixed_abs, tag = 'smem constant byte address 0x4 - core index']
  #allocation1 [shape = 'u32[72,128]{1,0:T(1,128)}', space=vmem, size = 0x9000, scoped, tag = 'internal scratch']
  %s0 = inlined_call_operand.hbm [shape: bf16[2,3,16,128], index: 0, kind: input, shape index: {}]
  %s1 = inlined_call_operand.hbm [shape: f32[1,2,3,8,128], index: 1, kind: output, shape index: {}]
  %s2 = sld [smem:[#allocation0]]
  $region45: #{tpu_custom_call.1} parent=0
    _
  %s4 = ssub.s32 1, %s2
  %s5 = scalar_select 0, %s4, %s2
  $region1: #{tpu_custom_call.1} parent=0
    #allocation2 [shape = 'u8[24576]{0}', space=vmem, size = 0x6000, scoped, tag = 'input window, operand 0']
    #allocation3 [shape = 's32[2]{0}', space=sflag, size = 0x8, scoped, tag = 'scoped memory for tpu_custom_call.1']
    #allocation4 [shape = 's32[2]{0}', space=sflag, size = 0x8, scoped, tag = 'scoped memory for tpu_custom_call.1']
    #allocation5 [shape = 'u8[24576]{0}', space=vmem, size = 0x6000, scoped, tag = 'output window, operand 0']
    %6 = vsyncpa [#allocation3], 0
    %s7 = scalar_lea.sflag [#allocation3], 1
    %8 = vsyncpa %s7, 0
    %9 = vsyncpa [#allocation4], 0
    %s10 = scalar_lea.sflag [#allocation4], 1
    %11 = vsyncpa %s10, 0
    loop: start=0, step=1, limit=4
    $region2: #{tpu_custom_call.1} parent=1 // loop_pre_header
      _
    $region3: #{tpu_custom_call.1} parent=1 // loop_header
      %s13 = sphi 0, %s17
      %p14 = scmp.ge.s32.totalorder %s13, 4
      %s20 = sphi 0, %s39
      %s21 = sphi 0, %s35
      %s22 = sphi 0, %s31
      %s23 = sphi 0, %s20
      %s24 = sphi 0, %s21
      %s25 = sphi 0, %s22
      %s26 = sphi 0, %s23
      %s27 = sphi 0, %s24
      %s28 = sphi 0, %s25
      %s50 = sphi 0, %s52
      %s53 = sphi 0, %s50
      %s54 = sphi 0, %s53
      %s70 = sphi 0, %s54
      %s78 = sphi 0, %s80
      %s81 = sphi 0, %s78
      %s82 = sphi 0, %s81
      %s98 = sphi 0, %s82
    $region4: #{tpu_custom_call.1} parent=1 // loop_header_branch
      %16 = sbr.rel (%p14) target = $region8
    $region5: #{tpu_custom_call.1} parent=1 // loop_body
      %s18 = ssub.s32 %s13, 1
      %s19 = ssub.s32 %s13, 2
      %s29 = sadd.s32 1, %s22
      %p30 = scmp.ge.s32.totalorder %s29, 1
      %s31 = scalar_select %p30, 0, %s29
      %s32 = sadd.s32 1, %s21
      %s33 = scalar_select %p30, %s32, %s21
      %p34 = scmp.ge.s32.totalorder %s33, 2
      %s35 = scalar_select %p34, 0, %s33
      %s36 = sadd.s32 1, %s20
      %s37 = scalar_select %p34, %s36, %s20
      %p38 = scmp.ge.s32.totalorder %s37, 1
      %s39 = scalar_select %p38, 0, %s37
      %s40 = sadd.s32 %s20, %s22
      %p41 = scmp.lt.s32.totalorder %s40, 0
      %s42 = scalar_select %p41, %s40, 0
      %s43 = sadd.s32 %s39, %s31
      %p44 = scmp.lt.s32.totalorder %s43, 0
      %s45 = scalar_select %p44, %s43, 0
      %s46 = ssub.s32 %s21, %s35
      %s47 = ssub.s32 %s42, %s45
      %s48 = sor.u32 %s46, %s47
      %p49 = scmp.eq.s32.totalorder %s48, 0
      %s51 = sadd.s32 %s50, 1
      %s52 = scalar_select %p49, %s50, %s51
      %p55 = pneg %p49
      %p56 = scmp.eq.s32.totalorder %s13, 1
      %p57 = por %p55, %p56
      %p58 = scmp.ne.s32.totalorder %s50, %s53
      %p59 = scmp.eq.s32.totalorder %s13, 0
      %p60 = por %p58, %p59
      %p61 = scmp.ne.s32.totalorder %s50, %s53
      %p62 = scmp.eq.s32.totalorder %s18, 1
      %p63 = por %p61, %p62
      %p64 = scmp.ne.s32.totalorder %s53, %s54
      %p65 = scmp.eq.s32.totalorder %s18, 0
      %p66 = por %p64, %p65
      %p67 = scmp.ne.s32.totalorder %s53, %s54
      %p68 = scmp.eq.s32.totalorder %s19, 1
      %p69 = por %p67, %p68
      %p71 = scmp.ne.s32.totalorder %s54, %s70
      %p72 = scmp.eq.s32.totalorder %s19, 0
      %p73 = por %p71, %p72
      %s74 = ssub.s32 %s20, %s39
      %s75 = ssub.s32 %s21, %s35
      %s76 = sor.u32 %s74, %s75
      %p77 = scmp.eq.s32.totalorder %s76, 0
      %s79 = sadd.s32 %s78, 1
      %s80 = scalar_select %p77, %s78, %s79
      %p83 = pneg %p77
      %p84 = scmp.eq.s32.totalorder %s13, 1
      %p85 = por %p83, %p84
      %p86 = scmp.ne.s32.totalorder %s78, %s81
      %p87 = scmp.eq.s32.totalorder %s13, 0
      %p88 = por %p86, %p87
      %p89 = scmp.ne.s32.totalorder %s78, %s81
      %p90 = scmp.eq.s32.totalorder %s18, 1
      %p91 = por %p89, %p90
      %p92 = scmp.ne.s32.totalorder %s81, %s82
      %p93 = scmp.eq.s32.totalorder %s18, 0
      %p94 = por %p92, %p93
      %p95 = scmp.ne.s32.totalorder %s81, %s82
      %p96 = scmp.eq.s32.totalorder %s19, 1
      %p97 = por %p95, %p96
      %p99 = scmp.ne.s32.totalorder %s82, %s98
      %p100 = scmp.eq.s32.totalorder %s19, 0
      %p101 = por %p99, %p100
      %p102 = scmp.le.s32.totalorder 1, %s13
      %p103 = scmp.lt.s32.totalorder %s13, 3
      %p104 = pnand %p102, %p103
      %p105 = pneg %p104
      // Predicated region
      $region9: #{tpu_custom_call.1} parent=5 // pred_check
        _
      $region10: #{tpu_custom_call.1} parent=5 // pred_check_branch
        %107 = sbr.rel (%p104) target = $region12
      $region11: #{tpu_custom_call.1} parent=5 // pred_region
        %s108 = ssub.s32 %s13, 1
      $region12: #{tpu_custom_call.1} parent=5 // pred_fallthru
        _
      %p109 = scmp.lt.s32.totalorder %s13, 2
      // Predicated region
      $region13: #{tpu_custom_call.1} parent=5 // pred_check
        %p110 = pneg %p109
      $region14: #{tpu_custom_call.1} parent=5 // pred_check_branch
        %112 = sbr.rel (%p110) target = $region16
      $region15: #{tpu_custom_call.1} parent=5 // pred_region
        // Predicated region
        $region17: #{tpu_custom_call.1} parent=15 // pred_check
          %p113 = pneg %p60
        $region18: #{tpu_custom_call.1} parent=15 // pred_check_branch
          %115 = sbr.rel (%p113) target = $region20
        $region19: #{tpu_custom_call.1} parent=15 // pred_region
          %s116 = sand.u32 %s50, 1
          %s117 = scalar_lea.sflag [#allocation3], %s116
          %s118 = sand.u32 %s50, 1
          %s119 = smul.addr %s118, 24
          %s120 = scalar_lea.vmem [#allocation2], %s119
          %s121 = sadd.s32 %s20, %s22
          %p122 = scmp.lt.s32.totalorder %s121, 0
          %s123 = scalar_select %p122, %s121, 0
          %s124 = smul.u32 2, %s123
          %126 = vsyncadd %s117, 0
          %s127 = smul.addr %s21, 6
          %s128 = sadd.s32 %s124, %s127
          %s129 = smul.addr %s128, 4
          %s130 = scalar_lea.hbm %s0, %s129
          %s131 = sshll.u32 %s130, 4
          %s132 = int_to_ptr.hbm [resolvable:$true] %s131
          %s133 = sshll.u32 %s120, 4
          %s134 = int_to_ptr.vmem [resolvable:$true] %s133
          %139 = dma.hbm_to_vmem [thread:$0]  %s132, 384, %s134, %s117, 64, 64, 4
        $region20: #{tpu_custom_call.1} parent=15 // pred_fallthru
          _
      $region16: #{tpu_custom_call.1} parent=5 // pred_fallthru
        _
      %p140 = scmp.le.s32.totalorder 1, %s13
      %p141 = scmp.lt.s32.totalorder %s13, 3
      %p142 = pnand %p140, %p141
      %p143 = pneg %p142
      // Predicated region
      $region21: #{tpu_custom_call.1} parent=5 // pred_check
        _
      $region22: #{tpu_custom_call.1} parent=5 // pred_check_branch
        %145 = sbr.rel (%p142) target = $region24
      $region23: #{tpu_custom_call.1} parent=5 // pred_region
        %s146 = ssub.s32 %s13, 1
        %s147 = sand.u32 %s53, 1
        %s148 = scalar_lea.sflag [#allocation3], %s147
        %s149 = sand.u32 %s53, 1
        %s150 = smul.addr %s149, 24
        %s151 = scalar_lea.vmem [#allocation2], %s150
        // Predicated region
        $region25: #{tpu_custom_call.1} parent=23 // pred_check
          %p152 = pneg %p66
        $region26: #{tpu_custom_call.1} parent=23 // pred_check_branch
          %154 = sbr.rel (%p152) target = $region28
        $region27: #{tpu_custom_call.1} parent=23 // pred_region
          %156 = dma.done %s148, 384
        $region28: #{tpu_custom_call.1} parent=23 // pred_fallthru
          _
        %s157 = sand.u32 %s53, 1
        %s158 = scalar_lea.sflag [#allocation3], %s157
        %s159 = sand.u32 %s53, 1
        %s160 = smul.addr %s159, 24
        %s161 = scalar_lea.vmem [#allocation2], %s160
        %p162 = pneg %p66
        %p163 = pneg %p63
        %p164 = pneg %p94
        %p165 = pneg %p91
        %s166 = sand.u32 %s81, 1
        %s167 = scalar_lea.sflag [#allocation4], %s166
        %s168 = sand.u32 %s81, 1
        %s169 = smul.addr %s168, 24
        %s170 = scalar_lea.vmem [#allocation5], %s169
        %s171 = sadd.s32 %s23, %s25
        %p172 = scmp.lt.s32.totalorder %s171, 0
        %s173 = scalar_select %p172, %s171, 0
        %s174 = smul.u32 2, %s173
        %p175 = scmp.eq.s32.totalorder %s25, 0
        // Predicated region
        $region29: #{tpu_custom_call.1} parent=23 // pred_check
          %p176 = pneg %p175
        $region30: #{tpu_custom_call.1} parent=23 // pred_check_branch
          %178 = sbr.rel (%p176) target = $region32
        $region31: #{tpu_custom_call.1} parent=23 // pred_region
          %179 = vst [vmem:[%s170] sm:$0xff] 0.0
          %180 = vst [vmem:[%s170 + $0x8] sm:$0xff] 0.0
          %181 = vst [vmem:[%s170 + $0x10] sm:$0xff] 0.0
        $region32: #{tpu_custom_call.1} parent=23 // pred_fallthru
          _
        %v182 = vld [vmem:[%s151] sm:$0xf]
        %v183 = vld [vmem:[%s151 + $0x4] sm:$0xf]
        %v184 = vld [vmem:[%s151 + $0x8] sm:$0xf]
        %v185 = vld [vmem:[%s151 + $0xc] sm:$0xf]
        %v186 = vld [vmem:[%s151 + $0x10] sm:$0xf]
        %v187 = vld [vmem:[%s151 + $0x14] sm:$0xf]
        %v188 = vunpack.c.l.bf16 %v182
        %v189 = vunpack.c.l.bf16 %v183
        %v190 = vunpack.c.l.bf16 %v184
        %v191 = vunpack.c.l.bf16 %v185
        %v192 = vunpack.c.l.bf16 %v186
        %v193 = vunpack.c.l.bf16 %v187
        %v194 = vadd.f32 %v188, %v189
        %v195 = vadd.f32 %v190, %v191
        %v196 = vadd.f32 %v192, %v193
        %v197 = vld [vmem:[%s170] sm:$0xff]
        %v198 = vld [vmem:[%s170 + $0x8] sm:$0xff]
        %v199 = vld [vmem:[%s170 + $0x10] sm:$0xff]
        %v200 = vadd.f32 %v197, %v194
        %v201 = vadd.f32 %v198, %v195
        %v202 = vadd.f32 %v199, %v196
        %203 = vst [vmem:[%s170] sm:$0xff] %v200
        %204 = vst [vmem:[%s170 + $0x8] sm:$0xff] %v201
        %205 = vst [vmem:[%s170 + $0x10] sm:$0xff] %v202
        %s206 = sand.u32 %s81, 1
        %s207 = scalar_lea.sflag [#allocation4], %s206
        %s208 = sand.u32 %s81, 1
        %s209 = smul.addr %s208, 24
        %s210 = scalar_lea.vmem [#allocation5], %s209
        // Predicated region
        $region33: #{tpu_custom_call.1} parent=23 // pred_check
          %p211 = pneg %p91
        $region34: #{tpu_custom_call.1} parent=23 // pred_check_branch
          %213 = sbr.rel (%p211) target = $region36
        $region35: #{tpu_custom_call.1} parent=23 // pred_region
          %215 = vsyncadd %s207, 0
          %s216 = smul.addr %s24, 3
          %s217 = smul.addr %s23, 6
          %s218 = sadd.s32 %s216, %s217
          %s219 = smul.addr %s218, 8
          %s220 = scalar_lea.hbm %s1, %s219
          %s221 = sshll.u32 %s210, 4
          %s222 = int_to_ptr.vmem [resolvable:$true] %s221
          %s223 = sshll.u32 %s220, 4
          %s224 = int_to_ptr.hbm [resolvable:$true] %s223
          %229 = dma.vmem_to_hbm [thread:$0]  %s222, 384, %s224, %s207, 128, 128, 8
        $region36: #{tpu_custom_call.1} parent=23 // pred_fallthru
          _
      $region24: #{tpu_custom_call.1} parent=5 // pred_fallthru
        _
      %p230 = scmp.le.s32.totalorder 2, %s13
      // Predicated region
      $region37: #{tpu_custom_call.1} parent=5 // pred_check
        %p231 = pneg %p230
      $region38: #{tpu_custom_call.1} parent=5 // pred_check_branch
        %233 = sbr.rel (%p231) target = $region40
      $region39: #{tpu_custom_call.1} parent=5 // pred_region
        %s234 = ssub.s32 %s13, 2
        // Predicated region
        $region41: #{tpu_custom_call.1} parent=39 // pred_check
          %p235 = pneg %p97
        $region42: #{tpu_custom_call.1} parent=39 // pred_check_branch
          %237 = sbr.rel (%p235) target = $region44
        $region43: #{tpu_custom_call.1} parent=39 // pred_region
          %s238 = sand.u32 %s82, 1
          %s239 = scalar_lea.sflag [#allocation4], %s238
          %s240 = sand.u32 %s82, 1
          %s241 = smul.addr %s240, 24
          %s242 = scalar_lea.vmem [#allocation5], %s241
          %244 = dma.done %s239, 384
        $region44: #{tpu_custom_call.1} parent=39 // pred_fallthru
          _
      $region40: #{tpu_custom_call.1} parent=5 // pred_fallthru
        _
    $region6: #{tpu_custom_call.1} parent=1 // loop_footer
      %s17 = sadd.s32 1, %s13
    $region7: #{tpu_custom_call.1} parent=1 // loop_footer_branch
      %12 = sbr.rel target = $region3
    $region8: #{tpu_custom_call.1} parent=1 // loop_exit
      _
    %245 = vsyncpa [#allocation3], 1
    %s246 = scalar_lea.sflag [#allocation3], 1
    %247 = vsyncpa %s246, 1
    %248 = vsyncpa [#allocation4], 1
    %s249 = scalar_lea.sflag [#allocation4], 1
    %250 = vsyncpa %s249, 1

</llo_original>
